<compile_context>
chip_gen: v7x
topology: tpu7x:2x2x1
jax: 0.10.0
libtpu: 0.0.40
codegen_flags: <defaults>
</compile_context>

<pallas_src>
import jax
import jax.numpy as jnp
from jax.experimental import pallas as pl
from jax.experimental.pallas import tpu as pltpu


def _round_up(n, m):
    return ((n + m - 1) // m) * m


def _mlp_softmax_kernel(x_ref, w1_ref, b1_ref, w2_ref, b2_ref, o_ref):
    # fc1: x @ W1 (bf16 operands, f32 accumulation on the MXU) + b1 (f32)
    h = jnp.dot(x_ref[...], w1_ref[...], preferred_element_type=jnp.float32)
    h = h + b1_ref[...]                       # b1 is [1, Hp], broadcasts over the batch tile
    # fc2: ReLU (f32 on the VPU)
    h = jnp.maximum(h, 0.0)
    # fc3: Dropout(p=0.5) is an identity at inference.
    # TODO(synk): training-mode dropout (pltpu.prng_seed + prng_random_bits mask, 1/(1-p) scale) omitted.
    # fc4: h @ W2 + b2  (cast h to bf16 for the MXU, accumulate f32)
    logits = jnp.dot(h.astype(w2_ref.dtype), w2_ref[...],
                     preferred_element_type=jnp.float32)
    logits = logits + b2_ref[...]             # padded classes carry -1e30 -> exp() == 0
    # Softmax over dim=1 (classes), numerically stable, f32.
    m = jnp.max(logits, axis=1, keepdims=True)
    e = jnp.exp(logits - m)
    denom = jnp.sum(e, axis=1, keepdims=True)
    o_ref[...] = (e * pl.reciprocal(denom, approx=True)).astype(o_ref.dtype)


def multiclass_perceptron_forward(x, w1, b1, w2, b2, *, tb=512,
                                  vmem_budget_bytes=24 * 1024 * 1024):
    """x: [B, D] f32; w1: [D, H]; b1: [H]; w2: [H, C]; b2: [C] (weights pre-transposed vs. PyTorch)."""
    B, D = x.shape
    H = w1.shape[1]
    C = w2.shape[1]
    Hp = _round_up(H, 128)   # lane-pad hidden dim
    Cp = _round_up(C, 128)   # lane-pad class dim -> unmasked full-lane output stores

    # Padded, bf16 MXU operands (zero pad is exact in bf16); biases stay f32.
    w1_p = jnp.zeros((D, Hp), jnp.bfloat16).at[:, :H].set(w1.astype(jnp.bfloat16))
    b1_p = jnp.zeros((1, Hp), jnp.float32).at[:, :H].set(b1.astype(jnp.float32))
    w2_p = jnp.zeros((Hp, Cp), jnp.bfloat16).at[:H, :C].set(w2.astype(jnp.bfloat16))
    # Padded class logits must not pollute the softmax denominator -> bias them to -1e30.
    b2_p = jnp.full((1, Cp), -1e30, jnp.float32).at[:, :C].set(b2.astype(jnp.float32))

    # Batch tile: start at `tb` (or the whole rounded batch if smaller) and shrink until the
    # double-buffered x/out tiles plus the resident weights fit a conservative VMEM budget
    # (sized for v7x's 32 MiB default scoped VMEM; v5e/v6e have extra headroom).
    TB = min(tb, _round_up(B, 8))

    def _vmem_bytes(tb_):
        x_buf = 2 * tb_ * D * 2        # bf16 x, double-buffered
        o_buf = 2 * tb_ * Cp * 4       # f32 out, double-buffered
        w_res = D * Hp * 2 + Hp * Cp * 2 + Hp * 4 + Cp * 4  # resident weights/biases
        return x_buf + o_buf + w_res

    while TB > 8 and _vmem_bytes(TB) > vmem_budget_bytes:
        TB //= 2
    TB = max(8, TB - (TB % 8))

    Bp = _round_up(B, TB)
    x_p = jnp.zeros((Bp, D), jnp.bfloat16).at[:B, :].set(x.astype(jnp.bfloat16))

    cost = pl.CostEstimate(
        flops=2 * Bp * (D * Hp + Hp * Cp),
        transcendentals=Bp * Cp,
        bytes_accessed=(Bp * D * 2 + D * Hp * 2 + Hp * 4
                        + Hp * Cp * 2 + Cp * 4 + Bp * Cp * 4),
    )

    out = pl.pallas_call(
        _mlp_softmax_kernel,
        out_shape=jax.ShapeDtypeStruct((Bp, Cp), jnp.float32),
        grid=(Bp // TB,),
        in_specs=[
            pl.BlockSpec((TB, D), lambda i: (i, 0)),     # x: tiled over batch, pipelined
            pl.BlockSpec((D, Hp), lambda i: (0, 0)),     # W1: constant index -> VMEM-resident
            pl.BlockSpec((1, Hp), lambda i: (0, 0)),     # b1: resident
            pl.BlockSpec((Hp, Cp), lambda i: (0, 0)),    # W2: resident
            pl.BlockSpec((1, Cp), lambda i: (0, 0)),     # b2: resident
        ],
        out_specs=pl.BlockSpec((TB, Cp), lambda i: (i, 0)),
        compiler_params=pltpu.CompilerParams(
            dimension_semantics=("parallel",),           # shards batch tiles across TCs on v7x
        ),
        cost_estimate=cost,
    )(x_p, w1_p, b1_p, w2_p, b2_p)

    return out[:B, :C]


def reference_forward(x, w1, b1, w2, b2):
    """Pure-JAX f32 reference of the PyTorch module's (eval-mode) forward."""
    h = jnp.maximum(x @ w1 + b1, 0.0)
    logits = h @ w2 + b2
    return jax.nn.softmax(logits, axis=1)


def init_params(key, input_size, num_classes):
    """Deterministic init mimicking nn.Linear (uniform +/- 1/sqrt(fan_in))."""
    layer3 = input_size // 4
    k1, k2, k3, k4 = jax.random.split(key, 4)
    lim1 = 1.0 / jnp.sqrt(jnp.float32(input_size))
    lim2 = 1.0 / jnp.sqrt(jnp.float32(layer3))
    # Stored pre-transposed: [in_features, out_features]
    w1 = jax.random.uniform(k1, (input_size, layer3), jnp.float32, -lim1, lim1)
    b1 = jax.random.uniform(k2, (layer3,), jnp.float32, -lim1, lim1)
    w2 = jax.random.uniform(k3, (layer3, num_classes), jnp.float32, -lim2, lim2)
    b2 = jax.random.uniform(k4, (num_classes,), jnp.float32, -lim2, lim2)
    return w1, b1, w2, b2


if __name__ == "__main__":
    input_size = 32
    num_classes = 8
    batch = 8

    key = jax.random.PRNGKey(0)
    kx, kp = jax.random.split(key)
    x = jax.random.normal(kx, (batch, input_size), jnp.float32)
    w1, b1, w2, b2 = init_params(kp, input_size, num_classes)

    out = multiclass_perceptron_forward(x, w1, b1, w2, b2)
    out = jax.block_until_ready(out)

    # Sanity: shape, rows sum to ~1 (approx reciprocal + bf16 operands -> loose tolerance),
    # and agreement with a pure-JAX f32 reference.
    ref = reference_forward(x, w1, b1, w2, b2)
    row_sums = jnp.sum(out, axis=1)
    assert out.shape == (batch, num_classes)
    assert jnp.allclose(row_sums, jnp.ones_like(row_sums), atol=1e-2)
    assert jnp.allclose(out, ref, atol=5e-2)

    print("KERNEL_OK")
</pallas_src>

<mosaic_0001>
module attributes {stable_mosaic.version = 11 : i64} {
  func.func @_mlp_softmax_kernel(%arg0: i32, %arg1: memref<8x32xbf16, #tpu.memory_space<vmem>>, %arg2: memref<32x128xbf16, #tpu.memory_space<vmem>>, %arg3: memref<1x128xf32, #tpu.memory_space<vmem>>, %arg4: memref<128x128xbf16, #tpu.memory_space<vmem>>, %arg5: memref<1x128xf32, #tpu.memory_space<vmem>>, %arg6: memref<8x128xf32, #tpu.memory_space<vmem>>) attributes {dimension_semantics = [#tpu.dimension_semantics<parallel>], iteration_bounds = array<i64: 1>, scalar_prefetch = 0 : i64, scratch_operands = 0 : i64, tpu.core_type = #tpu.core_type<tc>, window_params = [{transform_indices = @transform_0, window_bounds = array<i64: 8, 32>}, {pipeline_mode = #tpu.pipeline_mode<synchronous>, transform_indices = @transform_1, window_bounds = array<i64: 32, 128>}, {pipeline_mode = #tpu.pipeline_mode<synchronous>, transform_indices = @transform_2, window_bounds = array<i64: 1, 128>}, {pipeline_mode = #tpu.pipeline_mode<synchronous>, transform_indices = @transform_3, window_bounds = array<i64: 128, 128>}, {pipeline_mode = #tpu.pipeline_mode<synchronous>, transform_indices = @transform_4, window_bounds = array<i64: 1, 128>}, {transform_indices = @transform_5, window_bounds = array<i64: 8, 128>}]} {
    %c0 = arith.constant 0 : index
    %c0_0 = arith.constant 0 : index
    %0 = vector.load %arg1[%c0, %c0_0] : memref<8x32xbf16, #tpu.memory_space<vmem>>, vector<8x32xbf16>
    %c0_1 = arith.constant 0 : index
    %c0_2 = arith.constant 0 : index
    %1 = vector.load %arg2[%c0_1, %c0_2] : memref<32x128xbf16, #tpu.memory_space<vmem>>, vector<32x128xbf16>
    %cst = arith.constant dense<0.000000e+00> : vector<8x128xf32>
    %2 = tpu.matmul %0, %1, %cst {dimension_numbers = #tpu.dot_dimension_numbers<[1], [0], [0], [1], [0, 0, 1, 1], [], []>} : vector<8x32xbf16>, vector<32x128xbf16>, vector<8x128xf32> -> vector<8x128xf32>
    %c0_3 = arith.constant 0 : index
    %c0_4 = arith.constant 0 : index
    %3 = vector.load %arg3[%c0_3, %c0_4] : memref<1x128xf32, #tpu.memory_space<vmem>>, vector<1x128xf32>
    %4 = vector.broadcast %3 : vector<1x128xf32> to vector<8x128xf32>
    %5 = arith.addf %2, %4 : vector<8x128xf32>
    %cst_5 = arith.constant 0.000000e+00 : f32
    %6 = vector.broadcast %cst_5 : f32 to vector<8x128xf32>
    %7 = arith.maximumf %5, %6 : vector<8x128xf32>
    %8 = arith.truncf %7 : vector<8x128xf32> to vector<8x128xbf16>
    %c0_6 = arith.constant 0 : index
    %c0_7 = arith.constant 0 : index
    %9 = vector.load %arg4[%c0_6, %c0_7] : memref<128x128xbf16, #tpu.memory_space<vmem>>, vector<128x128xbf16>
    %cst_8 = arith.constant dense<0.000000e+00> : vector<8x128xf32>
    %10 = tpu.matmul %8, %9, %cst_8 {dimension_numbers = #tpu.dot_dimension_numbers<[1], [0], [0], [1], [0, 0, 1, 1], [], []>} : vector<8x128xbf16>, vector<128x128xbf16>, vector<8x128xf32> -> vector<8x128xf32>
    %c0_9 = arith.constant 0 : index
    %c0_10 = arith.constant 0 : index
    %11 = vector.load %arg5[%c0_9, %c0_10] : memref<1x128xf32, #tpu.memory_space<vmem>>, vector<1x128xf32>
    %12 = vector.broadcast %11 : vector<1x128xf32> to vector<8x128xf32>
    %13 = arith.addf %10, %12 : vector<8x128xf32>
    %cst_11 = arith.constant dense<0xFF800000> : vector<8xf32>
    %14 = vector.multi_reduction <maximumf>, %13, %cst_11 [1] : vector<8x128xf32> to vector<8xf32>
    %15 = vector.shape_cast %14 : vector<8xf32> to vector<8x1xf32>
    %16 = vector.broadcast %15 : vector<8x1xf32> to vector<8x128xf32>
    %17 = arith.subf %13, %16 : vector<8x128xf32>
    %18 = math.exp %17 : vector<8x128xf32>
    %cst_12 = arith.constant dense<0.000000e+00> : vector<8xf32>
    %19 = vector.multi_reduction <add>, %18, %cst_12 [1] : vector<8x128xf32> to vector<8xf32>
    %20 = vector.shape_cast %19 : vector<8xf32> to vector<8x1xf32>
    %21 = tpu.reciprocal %20 {approx = true} : vector<8x1xf32> -> vector<8x1xf32>
    %22 = vector.broadcast %21 : vector<8x1xf32> to vector<8x128xf32>
    %23 = arith.mulf %18, %22 : vector<8x128xf32>
    %c0_13 = arith.constant 0 : index
    %c0_14 = arith.constant 0 : index
    %24 = vector.load %arg6[%c0_13, %c0_14] : memref<8x128xf32, #tpu.memory_space<vmem>>, vector<8x128xf32>
    tpu.vector_store %arg6[%c0_13, %c0_14], %23 {strides = array<i32>} : memref<8x128xf32, #tpu.memory_space<vmem>>, vector<8x128xf32>,
    return
  }
  func.func @transform_0(%arg0: i32) -> (i32, i32) {
    %c0_i32 = arith.constant 0 : i32
    %c0_i32_0 = arith.constant 0 : i32
    return %arg0, %c0_i32 : i32, i32
  }
  func.func @transform_1(%arg0: i32) -> (i32, i32) {
    %c0_i32 = arith.constant 0 : i32
    %c0_i32_0 = arith.constant 0 : i32
    %c0_i32_1 = arith.constant 0 : i32
    return %c0_i32, %c0_i32_0 : i32, i32
  }
  func.func @transform_2(%arg0: i32) -> (i32, i32) {
    %c0_i32 = arith.constant 0 : i32
    %c0_i32_0 = arith.constant 0 : i32
    %c0_i32_1 = arith.constant 0 : i32
    return %c0_i32, %c0_i32_0 : i32, i32
  }
  func.func @transform_3(%arg0: i32) -> (i32, i32) {
    %c0_i32 = arith.constant 0 : i32
    %c0_i32_0 = arith.constant 0 : i32
    %c0_i32_1 = arith.constant 0 : i32
    return %c0_i32, %c0_i32_0 : i32, i32
  }
  func.func @transform_4(%arg0: i32) -> (i32, i32) {
    %c0_i32 = arith.constant 0 : i32
    %c0_i32_0 = arith.constant 0 : i32
    %c0_i32_1 = arith.constant 0 : i32
    return %c0_i32, %c0_i32_0 : i32, i32
  }
  func.func @transform_5(%arg0: i32) -> (i32, i32) {
    %c0_i32 = arith.constant 0 : i32
    %c0_i32_0 = arith.constant 0 : i32
    return %arg0, %c0_i32 : i32, i32
  }
}

</mosaic_0001>

<llo_original>
// kernel: tpu_custom_call.1
$region0: #{tpu_custom_call.1}
  #allocation0 [shape = 'u32[]', space=smem, size = 0x4, offset = 0x4, fixed_abs, tag = 'smem constant byte address 0x4 - core index']
  #allocation1 [shape = 'u32[144,128]{1,0:T(1,128)}', space=vmem, size = 0x12000, scoped, tag = 'internal scratch']
  %s0 = inlined_call_operand.hbm [shape: bf16[8,32], index: 0, kind: input, shape index: {}]
  %s1 = inlined_call_operand.hbm [shape: bf16[32,128], index: 1, kind: input, shape index: {}]
  %s2 = inlined_call_operand.vmem [shape: f32[1,128], index: 2, kind: input, shape index: {}]
  %s3 = inlined_call_operand.hbm [shape: bf16[128,128], index: 3, kind: input, shape index: {}]
  %s4 = inlined_call_operand.vmem [shape: f32[1,128], index: 4, kind: input, shape index: {}]
  %s5 = inlined_call_operand.hbm [shape: f32[8,128], index: 5, kind: output, shape index: {}]
  %s6 = sld [smem:[#allocation0]]
  $region42: #{tpu_custom_call.1} parent=0
    _
  %s8 = ssub.s32 1, %s6
  %s9 = scalar_select 0, %s8, %s6
  $region1: #{tpu_custom_call.1} parent=0
    #allocation2 [shape = 'u8[2048]{0}', space=vmem, size = 0x800, scoped, tag = 'input window, operand 0, single buffered']
    #allocation3 [shape = 's32[1]{0}', space=sflag, size = 0x4, scoped, tag = 'scoped memory for tpu_custom_call.1']
    #allocation4 [shape = 's32[1]{0}', space=sflag, size = 0x4, scoped, tag = 'scoped memory for tpu_custom_call.1']
    #allocation5 [shape = 'u8[8192]{0}', space=vmem, size = 0x2000, scoped, tag = 'input window, operand 1, single buffered']
    #allocation6 [shape = 's32[1]{0}', space=sflag, size = 0x4, scoped, tag = 'scoped memory for tpu_custom_call.1']
    #allocation7 [shape = 'u8[32768]{0}', space=vmem, size = 0x8000, scoped, tag = 'input window, operand 3, single buffered']
    #allocation8 [shape = 'u8[4096]{0}', space=vmem, size = 0x1000, scoped, tag = 'output window, operand 0, single buffered']
    %10 = vsyncpa [#allocation3], 0
    %11 = vsyncpa [#allocation6], 0
    %12 = vsyncpa [#allocation4], 0
    // Predicated region
    $region2: #{tpu_custom_call.1} parent=1 // pred_check
      _
    $region3: #{tpu_custom_call.1} parent=1 // pred_check_branch
      %14 = sbr.rel (0) target = $region5
    $region4: #{tpu_custom_call.1} parent=1 // pred_region
      %s16 = ssub.s32 64, 64
      %17 = vsyncadd [#allocation3], %s16
      %s19 = sshll.u32 [#allocation2], 4
      %s20 = int_to_ptr.vmem [resolvable:$true] %s19
      %22 = dma.hbm_to_vmem [thread:$0]  %s0, 64, %s20, [#allocation3]
    $region5: #{tpu_custom_call.1} parent=1 // pred_fallthru
      _
    // Predicated region
    $region6: #{tpu_custom_call.1} parent=1 // pred_check
      _
    $region7: #{tpu_custom_call.1} parent=1 // pred_check_branch
      %24 = sbr.rel (0) target = $region9
    $region8: #{tpu_custom_call.1} parent=1 // pred_region
      %s26 = ssub.s32 256, 256
      %27 = vsyncadd [#allocation6], %s26
      %s28 = sshll.u32 [#allocation5], 4
      %s29 = int_to_ptr.vmem [resolvable:$true] %s28
      %34 = dma.hbm_to_vmem [thread:$0]  %s1, 256, %s29, [#allocation6], 64, 64, 4
    $region9: #{tpu_custom_call.1} parent=1 // pred_fallthru
      _
    // Predicated region
    $region10: #{tpu_custom_call.1} parent=1 // pred_check
      _
    $region11: #{tpu_custom_call.1} parent=1 // pred_check_branch
      %36 = sbr.rel (0) target = $region13
    $region12: #{tpu_custom_call.1} parent=1 // pred_region
      _
    $region13: #{tpu_custom_call.1} parent=1 // pred_fallthru
      _
    // Predicated region
    $region14: #{tpu_custom_call.1} parent=1 // pred_check
      _
    $region15: #{tpu_custom_call.1} parent=1 // pred_check_branch
      %38 = sbr.rel (0) target = $region17
    $region16: #{tpu_custom_call.1} parent=1 // pred_region
      %s40 = ssub.s32 1024, 1024
      %41 = vsyncadd [#allocation6], %s40
      %s42 = sshll.u32 [#allocation7], 4
      %s43 = int_to_ptr.vmem [resolvable:$true] %s42
      %48 = dma.hbm_to_vmem [thread:$0]  %s3, 1024, %s43, [#allocation6], 64, 64, 4
    $region17: #{tpu_custom_call.1} parent=1 // pred_fallthru
      _
    // Predicated region
    $region18: #{tpu_custom_call.1} parent=1 // pred_check
      _
    $region19: #{tpu_custom_call.1} parent=1 // pred_check_branch
      %50 = sbr.rel (0) target = $region21
    $region20: #{tpu_custom_call.1} parent=1 // pred_region
      _
    $region21: #{tpu_custom_call.1} parent=1 // pred_fallthru
      _
    // Predicated region
    $region22: #{tpu_custom_call.1} parent=1 // pred_check
      _
    $region23: #{tpu_custom_call.1} parent=1 // pred_check_branch
      %52 = sbr.rel (0) target = $region25
    $region24: #{tpu_custom_call.1} parent=1 // pred_region
      %53 = dma.done [#allocation3], 64
    $region25: #{tpu_custom_call.1} parent=1 // pred_fallthru
      _
    // Predicated region
    $region26: #{tpu_custom_call.1} parent=1 // pred_check
      _
    $region27: #{tpu_custom_call.1} parent=1 // pred_check_branch
      %55 = sbr.rel (0) target = $region29
    $region28: #{tpu_custom_call.1} parent=1 // pred_region
      %56 = dma.done [#allocation6], 256
    $region29: #{tpu_custom_call.1} parent=1 // pred_fallthru
      _
    // Predicated region
    $region30: #{tpu_custom_call.1} parent=1 // pred_check
      _
    $region31: #{tpu_custom_call.1} parent=1 // pred_check_branch
      %58 = sbr.rel (0) target = $region33
    $region32: #{tpu_custom_call.1} parent=1 // pred_region
      %59 = dma.done [#allocation6], 1024
    $region33: #{tpu_custom_call.1} parent=1 // pred_fallthru
      _
    %v61 = vld [vmem:[#allocation2] sm:$0xf]
    %v62 = vld [vmem:[#allocation5] sm:$0xf]
    %v63 = vld [vmem:[#allocation5 + $0x4] sm:$0xf]
    %v64 = vld [vmem:[#allocation5 + $0x8] sm:$0xf]
    %v65 = vld [vmem:[#allocation5 + $0xc] sm:$0xf]
    %v66 = vld [vmem:[%s2] sm:$0x1]
    %v68 = vlaneseq
    %v69 = vshrl.u32 %v68, 7
    %v70 = vsub.s32 0, %v69
    %v71 = vrot.slane %v66, %v70
    %v77 = vunpack.c.l.b16 %v62
    %v78 = vunpack.c.l.b16 %v63
    %v79 = vunpack.c.l.b16 %v64
    %v80 = vunpack.c.l.b16 %v65
    %v81 = vpack.c.b16 %v78, %v77
    %v82 = vpack.c.b16 %v80, %v79
    %vm85 = vcmask 261120
    %v87 = vsel %vm85, %v61, 0
    %89 = vmatprep.subr.bf16.mxu0 0
    %90 = vmatpush1.bf16.msra.mxu0 %v81
    %91 = vmatprep.subr.bf16.mxu0 0
    %92 = vmatpush1.bf16.msra.mxu0 %v82
    %93 = vmatprep.subr.bf16.mxu0 0
    %94 = vmatpush1.bf16.msra.mxu0 0
    %95 = vmatprep.subr.bf16.mxu0 0
    %96 = vmatpush1.bf16.msra.mxu0 0
    %97 = vmatprep.subr.bf16.mxu0 0
    %98 = vmatpush1.bf16.msra.mxu0 0
    %99 = vmatprep.subr.bf16.mxu0 0
    %100 = vmatpush1.bf16.msra.mxu0 0
    %101 = vmatprep.subr.bf16.mxu0 0
    %102 = vmatpush1.bf16.msra.mxu0 0
    %103 = vmatprep.subr.bf16.mxu0 0
    %104 = vmatpush1.bf16.msra.mxu0 0
    %105 = vmatprep.subr.bf16.mxu0 0
    %106 = vmatpush1.bf16.msra.mxu0 0
    %107 = vmatprep.subr.bf16.mxu0 0
    %108 = vmatpush1.bf16.msra.mxu0 0
    %109 = vmatprep.subr.bf16.mxu0 0
    %110 = vmatpush1.bf16.msra.mxu0 0
    %111 = vmatprep.subr.bf16.mxu0 0
    %112 = vmatpush1.bf16.msra.mxu0 0
    %113 = vmatprep.subr.bf16.mxu0 0
    %114 = vmatpush1.bf16.msra.mxu0 0
    %115 = vmatprep.subr.bf16.mxu0 0
    %116 = vmatpush1.bf16.msra.mxu0 0
    %117 = vmatprep.subr.bf16.mxu0 0
    %118 = vmatpush1.bf16.msra.mxu0 0
    %119 = vmatprep.subr.bf16.mxu0 0
    %120 = vmatpush1.bf16.msra.mxu0 0
    %121 = vmatprep.mubr.bf16.mxu0 0
    %122 = vmatmul.mubr.bf16.gmra.mrb[0].mxu0 %v87
    %v123 = vpop.f32.mrb[0].mxu0
    %v124 = vadd.f32 %v71, %v123
    %v125 = vpop.f32.mrb[0].mxu0
    %v126 = vpop.f32.mrb[0].mxu0
    %v127 = vpop.f32.mrb[0].mxu0
    %128 = vdwg.mxu0
    %v129 = vmax.f32 %v124, 0.0
    %v130 = vpack.c.bf16 %v129, %v129
    %v131 = vld [vmem:[#allocation7] sm:$0xf]
    %v132 = vld [vmem:[#allocation7 + $0x4] sm:$0xf]
    %v133 = vld [vmem:[#allocation7 + $0x8] sm:$0xf]
    %v134 = vld [vmem:[#allocation7 + $0xc] sm:$0xf]
    %v135 = vld [vmem:[#allocation7 + $0x10] sm:$0xf]
    %v136 = vld [vmem:[#allocation7 + $0x14] sm:$0xf]
    %v137 = vld [vmem:[#allocation7 + $0x18] sm:$0xf]
    %v138 = vld [vmem:[#allocation7 + $0x1c] sm:$0xf]
    %v139 = vld [vmem:[#allocation7 + $0x20] sm:$0xf]
    %v140 = vld [vmem:[#allocation7 + $0x24] sm:$0xf]
    %v141 = vld [vmem:[#allocation7 + $0x28] sm:$0xf]
    %v142 = vld [vmem:[#allocation7 + $0x2c] sm:$0xf]
    %v143 = vld [vmem:[#allocation7 + $0x30] sm:$0xf]
    %v144 = vld [vmem:[#allocation7 + $0x34] sm:$0xf]
    %v145 = vld [vmem:[#allocation7 + $0x38] sm:$0xf]
    %v146 = vld [vmem:[#allocation7 + $0x3c] sm:$0xf]
    %v147 = vld [vmem:[%s4] sm:$0x1]
    %v149 = vlaneseq
    %v150 = vshrl.u32 %v149, 7
    %v151 = vsub.s32 0, %v150
    %v152 = vrot.slane %v147, %v151
    %v170 = vunpack.c.l.b16 %v131
    %v171 = vunpack.c.l.b16 %v132
    %v172 = vunpack.c.l.b16 %v133
    %v173 = vunpack.c.l.b16 %v134
    %v174 = vunpack.c.l.b16 %v135
    %v175 = vunpack.c.l.b16 %v136
    %v176 = vunpack.c.l.b16 %v137
    %v177 = vunpack.c.l.b16 %v138
    %v178 = vunpack.c.l.b16 %v139
    %v179 = vunpack.c.l.b16 %v140
    %v180 = vunpack.c.l.b16 %v141
    %v181 = vunpack.c.l.b16 %v142
    %v182 = vunpack.c.l.b16 %v143
    %v183 = vunpack.c.l.b16 %v144
    %v184 = vunpack.c.l.b16 %v145
    %v185 = vunpack.c.l.b16 %v146
    %v186 = vpack.c.b16 %v171, %v170
    %v187 = vpack.c.b16 %v173, %v172
    %v188 = vpack.c.b16 %v175, %v174
    %v189 = vpack.c.b16 %v177, %v176
    %v190 = vpack.c.b16 %v179, %v178
    %v191 = vpack.c.b16 %v181, %v180
    %v192 = vpack.c.b16 %v183, %v182
    %v193 = vpack.c.b16 %v185, %v184
    %202 = vmatprep.subr.bf16.mxu0 0
    %203 = vmatpush1.bf16.msra.mxu0 %v186
    %204 = vmatprep.subr.bf16.mxu0 0
    %205 = vmatpush1.bf16.msra.mxu0 %v187
    %206 = vmatprep.subr.bf16.mxu0 0
    %207 = vmatpush1.bf16.msra.mxu0 %v188
    %208 = vmatprep.subr.bf16.mxu0 0
    %209 = vmatpush1.bf16.msra.mxu0 %v189
    %210 = vmatprep.subr.bf16.mxu0 0
    %211 = vmatpush1.bf16.msra.mxu0 %v190
    %212 = vmatprep.subr.bf16.mxu0 0
    %213 = vmatpush1.bf16.msra.mxu0 %v191
    %214 = vmatprep.subr.bf16.mxu0 0
    %215 = vmatpush1.bf16.msra.mxu0 %v192
    %216 = vmatprep.subr.bf16.mxu0 0
    %217 = vmatpush1.bf16.msra.mxu0 %v193
    %218 = vmatprep.subr.bf16.mxu0 0
    %219 = vmatpush1.bf16.msra.mxu0 0
    %220 = vmatprep.subr.bf16.mxu0 0
    %221 = vmatpush1.bf16.msra.mxu0 0
    %222 = vmatprep.subr.bf16.mxu0 0
    %223 = vmatpush1.bf16.msra.mxu0 0
    %224 = vmatprep.subr.bf16.mxu0 0
    %225 = vmatpush1.bf16.msra.mxu0 0
    %226 = vmatprep.subr.bf16.mxu0 0
    %227 = vmatpush1.bf16.msra.mxu0 0
    %228 = vmatprep.subr.bf16.mxu0 0
    %229 = vmatpush1.bf16.msra.mxu0 0
    %230 = vmatprep.subr.bf16.mxu0 0
    %231 = vmatpush1.bf16.msra.mxu0 0
    %232 = vmatprep.subr.bf16.mxu0 0
    %233 = vmatpush1.bf16.msra.mxu0 0
    %234 = vmatprep.mubr.bf16.mxu0 0
    %235 = vmatmul.mubr.bf16.gmra.mrb[0].mxu0 %v130
    %v236 = vpop.f32.mrb[0].mxu0
    %v237 = vadd.f32 %v152, %v236
    %v238 = vpop.f32.mrb[0].mxu0
    %v239 = vpop.f32.mrb[0].mxu0
    %v240 = vpop.f32.mrb[0].mxu0
    %241 = vdwg.mxu0
    %242 = vmax.xlane.f32.xlu0 %v237
    %v243 = vpop.xlane.xlu0 %242
    %v244 = vsub.f32 %v237, %v243
    %v245 = vmul.f32 %v244, 1.442695
    %v246 = vpow.pop %v245
    %247 = vadd.xlane.f32.xlu0 %v246
    %v248 = vpop.xlane.xlu0 %247
    %v249 = vrcp.pop %v248
    %v250 = vmul.f32 %v246, %v249
    %251 = vst [vmem:[#allocation8] sm:$0xff] %v250
    // Predicated region
    $region34: #{tpu_custom_call.1} parent=1 // pred_check
      _
    $region35: #{tpu_custom_call.1} parent=1 // pred_check_branch
      %253 = sbr.rel (0) target = $region37
    $region36: #{tpu_custom_call.1} parent=1 // pred_region
      %s255 = ssub.s32 128, 128
      %256 = vsyncadd [#allocation4], %s255
      %s258 = sshll.u32 [#allocation8], 4
      %s259 = int_to_ptr.vmem [resolvable:$true] %s258
      %261 = dma.vmem_to_hbm [thread:$0]  %s259, 128, %s5, [#allocation4]
    $region37: #{tpu_custom_call.1} parent=1 // pred_fallthru
      _
    // Predicated region
    $region38: #{tpu_custom_call.1} parent=1 // pred_check
      _
    $region39: #{tpu_custom_call.1} parent=1 // pred_check_branch
      %263 = sbr.rel (0) target = $region41
    $region40: #{tpu_custom_call.1} parent=1 // pred_region
      %264 = dma.done [#allocation4], 128
    $region41: #{tpu_custom_call.1} parent=1 // pred_fallthru
      _
    %265 = vsyncpa [#allocation3], 1
    %266 = vsyncpa [#allocation6], 1
    %267 = vsyncpa [#allocation4], 1

</llo_original>
